<compile_context>
chip_gen: v7x
topology: tpu7x:2x2x1
jax: 0.10.0
libtpu: 0.0.40
codegen_flags: <defaults>
</compile_context>

<pallas_src>
import jax
import jax.numpy as jnp
from jax.experimental import pallas as pl
from jax.experimental.pallas import tpu as pltpu

_LANE = 128


def _round_up(x, m):
    return ((x + m - 1) // m) * m


def _cdiv(a, b):
    return (a + b - 1) // b


def _vmem_capacity_bytes():
    """Physical VMEM of the attached TPU; conservative fallback = 64 MiB (v7x)."""
    try:
        info = pltpu.get_tpu_info()
        cap = getattr(info, "vmem_capacity_bytes", None)
        if cap:
            return int(cap)
    except Exception:
        pass
    return 64 * 1024 * 1024


def _make_mlp_kernel(num_layers, compute_dtype):
    """Fused kernel: Linear(+ReLU) x (num_layers-1), final Linear (no ReLU)."""
    cast_between_layers = jnp.dtype(compute_dtype).itemsize < 4

    def kernel(*refs):
        # refs = (x_ref, w0, b0, w1, b1, ..., w_{L-1}, b_{L-1}, o_ref)
        x_ref = refs[0]
        o_ref = refs[-1]
        wb = refs[1:-1]

        h = x_ref[...]
        for i in range(num_layers):
            w = wb[2 * i][...]                 # (in_p, out_p)
            b = wb[2 * i + 1][...]             # (1, out_p)
            h = jnp.dot(h, w, preferred_element_type=jnp.float32) + b
            if i < num_layers - 1:
                h = jnp.maximum(h, 0.0)        # ReLU on all but last layer
                if cast_between_layers:
                    # keep MXU operands narrow (bf16) across layers
                    h = h.astype(compute_dtype)
        o_ref[...] = h.astype(o_ref.dtype)

    return kernel


def prepare_mlp_params(weights, biases):
    """Pad params once, OUTSIDE the per-call jitted path.

    weights[i]: (in_i, out_i)  (already transposed vs. PyTorch's (out, in))
    biases[i] : (out_i,)

    Hidden-layer output widths are zero-padded to multiples of 128 (lane-dense
    matmuls / stores); the FINAL layer's output width is left unpadded so the
    kernel writes only the bytes the caller needs.  Input widths of layers>=1
    are padded to match the previous padded output; layer 0 keeps x's width.
    """
    num_layers = len(weights)
    padded_w, padded_b = [], []
    prev_out = weights[0].shape[0]             # x's feature width, unpadded
    for i, (w, b) in enumerate(zip(weights, biases)):
        d_in, d_out = w.shape
        d_in_p = prev_out
        is_last = (i == num_layers - 1)
        d_out_p = d_out if is_last else _round_up(d_out, _LANE)
        w_p = jnp.pad(w, ((0, d_in_p - d_in), (0, d_out_p - d_out)))
        b_p = jnp.pad(b, (0, d_out_p - d_out)).reshape(1, d_out_p)
        padded_w.append(w_p)
        padded_b.append(b_p)
        prev_out = d_out_p
    return padded_w, padded_b


def mlp_forward(x, padded_weights, padded_biases, *, tm=None):
    """Applies the MLP to x of shape (..., input_dim) using pre-padded params."""
    num_layers = len(padded_weights)
    assert len(padded_biases) == num_layers

    in_dim = x.shape[-1]
    out_dim = padded_weights[-1].shape[1]      # final layer kept unpadded
    lead_shape = x.shape[:-1]

    x2 = x.reshape(-1, in_dim)
    m = x2.shape[0]
    dtype_bytes = jnp.dtype(x.dtype).itemsize
    row_align = 16 if dtype_bytes == 2 else 8  # bf16 needs 16-row sublane tiles

    # --- generation-aware VMEM budget, also handed to the compiler. ---------
    vmem_cap = _vmem_capacity_bytes()
    budget = int(vmem_cap * 0.75)              # ~48 MiB on v7x, ~96 MiB on v5e/v6e

    # Weights/biases are single-buffered (pl.Buffered(1), constant index_map).
    resident = sum(w.size * w.dtype.itemsize + b.size * b.dtype.itemsize
                   for w, b in zip(padded_weights, padded_biases))
    widest = max([in_dim] + [w.shape[1] for w in padded_weights])
    per_row = (2 * (in_dim + out_dim) * dtype_bytes   # double-buffered x / out tiles
               + 2 * widest * 4)                      # f32 intermediates (VMEM)

    if tm is None:
        tm = max(row_align, (budget - resident) // max(per_row, 1))
    tm = min(tm, 1024)                                     # big tiles amortize step overhead
    tm = min(tm, _round_up(m, row_align))                  # don't exceed the problem
    tm = min(tm, _round_up(_cdiv(m, 2), row_align))        # >=2 grid steps -> both TCs on v7x
    tm = max(row_align, _round_up(tm, row_align))

    grid = (pl.cdiv(m, tm),)

    # --- BlockSpecs ----------------------------------------------------------
    # x / out tiled over rows; weights & biases whole-array, constant block
    # index and single-buffered so they stay resident without a wasted buffer.
    in_specs = [pl.BlockSpec((tm, in_dim), lambda i: (i, 0))]
    args = [x2]
    for w_p, b_p in zip(padded_weights, padded_biases):
        d_in_p, d_out_p = w_p.shape
        in_specs.append(pl.BlockSpec((d_in_p, d_out_p), lambda i: (0, 0),
                                     pipeline_mode=pl.Buffered(1)))
        in_specs.append(pl.BlockSpec((1, d_out_p), lambda i: (0, 0),
                                     pipeline_mode=pl.Buffered(1)))
        args.append(w_p)
        args.append(b_p)

    # out_dim equals the full last dim of the output array -> legal block shape,
    # and we write only the bytes we actually need (no wrapper slice).
    out_spec = pl.BlockSpec((tm, out_dim), lambda i: (i, 0))

    flops = 2 * m * sum(w.shape[0] * w.shape[1] for w in padded_weights)
    bytes_accessed = (x2.size * dtype_bytes
                      + m * out_dim * dtype_bytes
                      + sum(a.size * a.dtype.itemsize for a in args[1:]))
    cost = pl.CostEstimate(flops=int(flops), transcendentals=0,
                           bytes_accessed=int(bytes_accessed))

    compute_dtype = x.dtype if dtype_bytes == 2 else jnp.float32

    out = pl.pallas_call(
        _make_mlp_kernel(num_layers, compute_dtype),
        out_shape=jax.ShapeDtypeStruct((m, out_dim), x.dtype),
        grid_spec=pltpu.PrefetchScalarGridSpec(
            num_scalar_prefetch=0,
            grid=grid,
            in_specs=in_specs,
            out_specs=out_spec,
        ),
        compiler_params=pltpu.CompilerParams(
            dimension_semantics=("parallel",),   # row grid shards across TCs
            vmem_limit_bytes=int(budget),        # align Mosaic limit with our sizing
        ),
        cost_estimate=cost,
    )(*args)

    return out.reshape(*lead_shape, out_dim)


def init_mlp_params(key, input_dim, hidden_dim, output_dim, num_layers,
                    dtype=jnp.float32):
    """Deterministic synthetic init mirroring nn.Linear shapes.

    Returns weights already transposed to (in, out) and biases (out,).
    """
    h = [hidden_dim] * (num_layers - 1)
    dims_in = [input_dim] + h
    dims_out = h + [output_dim]

    weights, biases = [], []
    for d_in, d_out in zip(dims_in, dims_out):
        key, kw, kb = jax.random.split(key, 3)
        bound = 1.0 / (d_in ** 0.5)  # PyTorch Linear default uniform bound
        w = jax.random.uniform(kw, (d_in, d_out), dtype, -bound, bound)
        b = jax.random.uniform(kb, (d_out,), dtype, -bound, bound)
        weights.append(w)
        biases.append(b)
    return weights, biases


def mlp_reference(x, weights, biases):
    """Pure-JAX reference identical to the PyTorch forward."""
    num_layers = len(weights)
    h = x
    for i, (w, b) in enumerate(zip(weights, biases)):
        h = h @ w + b
        if i < num_layers - 1:
            h = jnp.maximum(h, 0.0)
    return h


if __name__ == "__main__":
    # MLP(input_dim=32, hidden=64, output_dim=16, num_layers=3) applied to
    # x of shape (batch=2, seq=8, 32).
    input_dim, hidden_dim, output_dim, num_layers = 32, 64, 16, 3

    key = jax.random.PRNGKey(0)
    key, kx = jax.random.split(key)
    x = jax.random.normal(kx, (2, 8, input_dim), dtype=jnp.float32)

    weights, biases = init_mlp_params(
        key, input_dim, hidden_dim, output_dim, num_layers)

    # Pad / transpose-free param prep happens ONCE, outside the jitted forward.
    padded_w, padded_b = prepare_mlp_params(weights, biases)
    padded_w = [jax.device_put(w) for w in padded_w]
    padded_b = [jax.device_put(b) for b in padded_b]

    run = jax.jit(mlp_forward)
    y = run(x, padded_w, padded_b)
    y = jax.block_until_ready(y)

    y_ref = mlp_reference(x, weights, biases)
    assert y.shape == (2, 8, output_dim), y.shape
    assert jnp.allclose(y, y_ref, atol=1e-5, rtol=1e-5), "mismatch vs reference"

    print("KERNEL_OK")
</pallas_src>

<mosaic_0001>
module attributes {stable_mosaic.version = 11 : i64} {
  func.func @kernel(%arg0: i32, %arg1: memref<8x32xf32, #tpu.memory_space<vmem>>, %arg2: memref<32x128xf32, #tpu.memory_space<vmem>>, %arg3: memref<1x128xf32, #tpu.memory_space<vmem>>, %arg4: memref<128x128xf32, #tpu.memory_space<vmem>>, %arg5: memref<1x128xf32, #tpu.memory_space<vmem>>, %arg6: memref<128x16xf32, #tpu.memory_space<vmem>>, %arg7: memref<1x16xf32, #tpu.memory_space<vmem>>, %arg8: memref<8x16xf32, #tpu.memory_space<vmem>>) attributes {dimension_semantics = [#tpu.dimension_semantics<parallel>], iteration_bounds = array<i64: 2>, scalar_prefetch = 0 : i64, scratch_operands = 0 : i64, tpu.core_type = #tpu.core_type<tc>, window_params = [{transform_indices = @transform_0, window_bounds = array<i64: 8, 32>}, {pipeline_mode = #tpu.pipeline_mode<synchronous>, transform_indices = @transform_1, window_bounds = array<i64: 32, 128>}, {pipeline_mode = #tpu.pipeline_mode<synchronous>, transform_indices = @transform_2, window_bounds = array<i64: 1, 128>}, {pipeline_mode = #tpu.pipeline_mode<synchronous>, transform_indices = @transform_3, window_bounds = array<i64: 128, 128>}, {pipeline_mode = #tpu.pipeline_mode<synchronous>, transform_indices = @transform_4, window_bounds = array<i64: 1, 128>}, {pipeline_mode = #tpu.pipeline_mode<synchronous>, transform_indices = @transform_5, window_bounds = array<i64: 128, 16>}, {pipeline_mode = #tpu.pipeline_mode<synchronous>, transform_indices = @transform_6, window_bounds = array<i64: 1, 16>}, {transform_indices = @transform_7, window_bounds = array<i64: 8, 16>}]} {
    %c0 = arith.constant 0 : index
    %c0_0 = arith.constant 0 : index
    %0 = vector.load %arg1[%c0, %c0_0] : memref<8x32xf32, #tpu.memory_space<vmem>>, vector<8x32xf32>
    %c0_1 = arith.constant 0 : index
    %c0_2 = arith.constant 0 : index
    %1 = vector.load %arg2[%c0_1, %c0_2] : memref<32x128xf32, #tpu.memory_space<vmem>>, vector<32x128xf32>
    %c0_3 = arith.constant 0 : index
    %c0_4 = arith.constant 0 : index
    %2 = vector.load %arg3[%c0_3, %c0_4] : memref<1x128xf32, #tpu.memory_space<vmem>>, vector<1x128xf32>
    %cst = arith.constant dense<0.000000e+00> : vector<8x128xf32>
    %3 = tpu.matmul %0, %1, %cst {dimension_numbers = #tpu.dot_dimension_numbers<[1], [0], [0], [1], [0, 0, 1, 1], [], []>} : vector<8x32xf32>, vector<32x128xf32>, vector<8x128xf32> -> vector<8x128xf32>
    %4 = vector.broadcast %2 : vector<1x128xf32> to vector<8x128xf32>
    %5 = arith.addf %3, %4 : vector<8x128xf32>
    %cst_5 = arith.constant 0.000000e+00 : f32
    %6 = vector.broadcast %cst_5 : f32 to vector<8x128xf32>
    %7 = arith.maximumf %5, %6 : vector<8x128xf32>
    %c0_6 = arith.constant 0 : index
    %c0_7 = arith.constant 0 : index
    %8 = vector.load %arg4[%c0_6, %c0_7] : memref<128x128xf32, #tpu.memory_space<vmem>>, vector<128x128xf32>
    %c0_8 = arith.constant 0 : index
    %c0_9 = arith.constant 0 : index
    %9 = vector.load %arg5[%c0_8, %c0_9] : memref<1x128xf32, #tpu.memory_space<vmem>>, vector<1x128xf32>
    %cst_10 = arith.constant dense<0.000000e+00> : vector<8x128xf32>
    %10 = tpu.matmul %7, %8, %cst_10 {dimension_numbers = #tpu.dot_dimension_numbers<[1], [0], [0], [1], [0, 0, 1, 1], [], []>} : vector<8x128xf32>, vector<128x128xf32>, vector<8x128xf32> -> vector<8x128xf32>
    %11 = vector.broadcast %9 : vector<1x128xf32> to vector<8x128xf32>
    %12 = arith.addf %10, %11 : vector<8x128xf32>
    %cst_11 = arith.constant 0.000000e+00 : f32
    %13 = vector.broadcast %cst_11 : f32 to vector<8x128xf32>
    %14 = arith.maximumf %12, %13 : vector<8x128xf32>
    %c0_12 = arith.constant 0 : index
    %c0_13 = arith.constant 0 : index
    %15 = vector.load %arg6[%c0_12, %c0_13] : memref<128x16xf32, #tpu.memory_space<vmem>>, vector<128x16xf32>
    %c0_14 = arith.constant 0 : index
    %c0_15 = arith.constant 0 : index
    %16 = vector.load %arg7[%c0_14, %c0_15] : memref<1x16xf32, #tpu.memory_space<vmem>>, vector<1x16xf32>
    %cst_16 = arith.constant dense<0.000000e+00> : vector<8x16xf32>
    %17 = tpu.matmul %14, %15, %cst_16 {dimension_numbers = #tpu.dot_dimension_numbers<[1], [0], [0], [1], [0, 0, 1, 1], [], []>} : vector<8x128xf32>, vector<128x16xf32>, vector<8x16xf32> -> vector<8x16xf32>
    %18 = vector.broadcast %16 : vector<1x16xf32> to vector<8x16xf32>
    %19 = arith.addf %17, %18 : vector<8x16xf32>
    %c0_17 = arith.constant 0 : index
    %c0_18 = arith.constant 0 : index
    %20 = vector.load %arg8[%c0_17, %c0_18] : memref<8x16xf32, #tpu.memory_space<vmem>>, vector<8x16xf32>
    tpu.vector_store %arg8[%c0_17, %c0_18], %19 {strides = array<i32>} : memref<8x16xf32, #tpu.memory_space<vmem>>, vector<8x16xf32>,
    return
  }
  func.func @transform_0(%arg0: i32) -> (i32, i32) {
    %c0_i32 = arith.constant 0 : i32
    %c0_i32_0 = arith.constant 0 : i32
    return %arg0, %c0_i32 : i32, i32
  }
  func.func @transform_1(%arg0: i32) -> (i32, i32) {
    %c0_i32 = arith.constant 0 : i32
    %c0_i32_0 = arith.constant 0 : i32
    %c0_i32_1 = arith.constant 0 : i32
    return %c0_i32, %c0_i32_0 : i32, i32
  }
  func.func @transform_2(%arg0: i32) -> (i32, i32) {
    %c0_i32 = arith.constant 0 : i32
    %c0_i32_0 = arith.constant 0 : i32
    %c0_i32_1 = arith.constant 0 : i32
    return %c0_i32, %c0_i32_0 : i32, i32
  }
  func.func @transform_3(%arg0: i32) -> (i32, i32) {
    %c0_i32 = arith.constant 0 : i32
    %c0_i32_0 = arith.constant 0 : i32
    %c0_i32_1 = arith.constant 0 : i32
    return %c0_i32, %c0_i32_0 : i32, i32
  }
  func.func @transform_4(%arg0: i32) -> (i32, i32) {
    %c0_i32 = arith.constant 0 : i32
    %c0_i32_0 = arith.constant 0 : i32
    %c0_i32_1 = arith.constant 0 : i32
    return %c0_i32, %c0_i32_0 : i32, i32
  }
  func.func @transform_5(%arg0: i32) -> (i32, i32) {
    %c0_i32 = arith.constant 0 : i32
    %c0_i32_0 = arith.constant 0 : i32
    %c0_i32_1 = arith.constant 0 : i32
    return %c0_i32, %c0_i32_0 : i32, i32
  }
  func.func @transform_6(%arg0: i32) -> (i32, i32) {
    %c0_i32 = arith.constant 0 : i32
    %c0_i32_0 = arith.constant 0 : i32
    %c0_i32_1 = arith.constant 0 : i32
    return %c0_i32, %c0_i32_0 : i32, i32
  }
  func.func @transform_7(%arg0: i32) -> (i32, i32) {
    %c0_i32 = arith.constant 0 : i32
    %c0_i32_0 = arith.constant 0 : i32
    return %arg0, %c0_i32 : i32, i32
  }
}

</mosaic_0001>

<llo_original>
// kernel: mlp_forward.1
$region0: #{mlp_forward.1}
  #allocation0 [shape = 'u32[]', space=smem, size = 0x4, offset = 0x4, fixed_abs, tag = 'smem constant byte address 0x4 - core index']
  #allocation1 [shape = 'u32[144,128]{1,0:T(1,128)}', space=vmem, size = 0x12000, scoped, tag = 'internal scratch']
  %s0 = inlined_call_operand.vmem [shape: f32[16,32], index: 0, kind: input, shape index: {}]
  %s1 = inlined_call_operand.hbm [shape: f32[32,128], index: 1, kind: input, shape index: {}]
  %s2 = inlined_call_operand.vmem [shape: f32[1,128], index: 2, kind: input, shape index: {}]
  %s3 = inlined_call_operand.vmem [shape: f32[128,128], index: 3, kind: input, shape index: {}]
  %s4 = inlined_call_operand.vmem [shape: f32[1,128], index: 4, kind: input, shape index: {}]
  %s5 = inlined_call_operand.vmem [shape: f32[128,16], index: 5, kind: input, shape index: {}]
  %s6 = inlined_call_operand.vmem [shape: f32[1,16], index: 6, kind: input, shape index: {}]
  %s7 = inlined_call_operand.hbm [shape: f32[16,16], index: 7, kind: output, shape index: {}]
  %s8 = sld [smem:[#allocation0]]
  $region65: #{mlp_forward.1} parent=0
    _
  %s10 = ssub.s32 1, %s8
  %s11 = scalar_select 0, %s10, %s8
  $region1: #{mlp_forward.1} parent=0
    #allocation2 [shape = 'u8[16384]{0}', space=vmem, size = 0x4000, scoped, tag = 'input window, operand 1, single buffered']
    #allocation3 [shape = 's32[2]{0}', space=sflag, size = 0x8, scoped, tag = 'scoped memory for mlp_forward.1']
    #allocation4 [shape = 's32[2]{0}', space=sflag, size = 0x8, scoped, tag = 'scoped memory for mlp_forward.1']
    #allocation5 [shape = 'u8[8192]{0}', space=vmem, size = 0x2000, scoped, tag = 'output window, operand 0']
    %12 = vsyncpa [#allocation3], 0
    %13 = vsyncpa [#allocation4], 0
    %s14 = scalar_lea.sflag [#allocation4], 1
    %15 = vsyncpa %s14, 0
    loop: start=0, step=1, limit=4
    $region2: #{mlp_forward.1} parent=1 // loop_pre_header
      _
    $region3: #{mlp_forward.1} parent=1 // loop_header
      %s17 = sphi 0, %s21
      %p18 = scmp.ge.s32.totalorder %s17, 4
      %s27 = sphi 0, %s29
      %s30 = sphi 0, %s27
      %s31 = sphi 0, %s30
      %s47 = sphi 0, %s31
      %s51 = sphi 0, %s51
      %s53 = sphi 0, %s51
      %s54 = sphi 0, %s53
      %s68 = sphi 0, %s54
      %s72 = sphi 0, %s72
      %s74 = sphi 0, %s72
      %s75 = sphi 0, %s74
      %s89 = sphi 0, %s75
      %s93 = sphi 0, %s93
      %s95 = sphi 0, %s93
      %s96 = sphi 0, %s95
      %s110 = sphi 0, %s96
      %s114 = sphi 0, %s114
      %s116 = sphi 0, %s114
      %s117 = sphi 0, %s116
      %s131 = sphi 0, %s117
      %s135 = sphi 0, %s135
      %s137 = sphi 0, %s135
      %s138 = sphi 0, %s137
      %s152 = sphi 0, %s138
      %s156 = sphi 0, %s156
      %s158 = sphi 0, %s156
      %s159 = sphi 0, %s158
      %s173 = sphi 0, %s159
      %s179 = sphi 0, %s181
      %s182 = sphi 0, %s179
      %s183 = sphi 0, %s182
      %s199 = sphi 0, %s183
    $region4: #{mlp_forward.1} parent=1 // loop_header_branch
      %20 = sbr.rel (%p18) target = $region8
    $region5: #{mlp_forward.1} parent=1 // loop_body
      %s22 = ssub.s32 %s17, 1
      %s23 = ssub.s32 %s17, 2
      %s24 = sadd.s32 %s17, 1
      %s25 = ssub.s32 %s17, %s24
      %p26 = scmp.eq.s32.totalorder %s25, 0
      %s28 = sadd.s32 %s27, 1
      %s29 = scalar_select %p26, %s27, %s28
      %p32 = pneg %p26
      %p33 = scmp.eq.s32.totalorder %s17, 1
      %p34 = por %p32, %p33
      %p35 = scmp.ne.s32.totalorder %s27, %s30
      %p36 = scmp.eq.s32.totalorder %s17, 0
      %p37 = por %p35, %p36
      %p38 = scmp.ne.s32.totalorder %s27, %s30
      %p39 = scmp.eq.s32.totalorder %s22, 1
      %p40 = por %p38, %p39
      %p41 = scmp.ne.s32.totalorder %s30, %s31
      %p42 = scmp.eq.s32.totalorder %s22, 0
      %p43 = por %p41, %p42
      %p44 = scmp.ne.s32.totalorder %s30, %s31
      %p45 = scmp.eq.s32.totalorder %s23, 1
      %p46 = por %p44, %p45
      %p48 = scmp.ne.s32.totalorder %s31, %s47
      %p49 = scmp.eq.s32.totalorder %s23, 0
      %p50 = por %p48, %p49
      %s52 = sadd.s32 %s51, 1
      %p55 = scmp.eq.s32.totalorder %s17, 1
      %p56 = scmp.ne.s32.totalorder %s51, %s53
      %p57 = scmp.eq.s32.totalorder %s17, 0
      %p58 = por %p56, %p57
      %p59 = scmp.ne.s32.totalorder %s51, %s53
      %p60 = scmp.eq.s32.totalorder %s22, 1
      %p61 = por %p59, %p60
      %p62 = scmp.ne.s32.totalorder %s53, %s54
      %p63 = scmp.eq.s32.totalorder %s22, 0
      %p64 = por %p62, %p63
      %p65 = scmp.ne.s32.totalorder %s53, %s54
      %p66 = scmp.eq.s32.totalorder %s23, 1
      %p67 = por %p65, %p66
      %p69 = scmp.ne.s32.totalorder %s54, %s68
      %p70 = scmp.eq.s32.totalorder %s23, 0
      %p71 = por %p69, %p70
      %s73 = sadd.s32 %s72, 1
      %p76 = scmp.eq.s32.totalorder %s17, 1
      %p77 = scmp.ne.s32.totalorder %s72, %s74
      %p78 = scmp.eq.s32.totalorder %s17, 0
      %p79 = por %p77, %p78
      %p80 = scmp.ne.s32.totalorder %s72, %s74
      %p81 = scmp.eq.s32.totalorder %s22, 1
      %p82 = por %p80, %p81
      %p83 = scmp.ne.s32.totalorder %s74, %s75
      %p84 = scmp.eq.s32.totalorder %s22, 0
      %p85 = por %p83, %p84
      %p86 = scmp.ne.s32.totalorder %s74, %s75
      %p87 = scmp.eq.s32.totalorder %s23, 1
      %p88 = por %p86, %p87
      %p90 = scmp.ne.s32.totalorder %s75, %s89
      %p91 = scmp.eq.s32.totalorder %s23, 0
      %p92 = por %p90, %p91
      %s94 = sadd.s32 %s93, 1
      %p97 = scmp.eq.s32.totalorder %s17, 1
      %p98 = scmp.ne.s32.totalorder %s93, %s95
      %p99 = scmp.eq.s32.totalorder %s17, 0
      %p100 = por %p98, %p99
      %p101 = scmp.ne.s32.totalorder %s93, %s95
      %p102 = scmp.eq.s32.totalorder %s22, 1
      %p103 = por %p101, %p102
      %p104 = scmp.ne.s32.totalorder %s95, %s96
      %p105 = scmp.eq.s32.totalorder %s22, 0
      %p106 = por %p104, %p105
      %p107 = scmp.ne.s32.totalorder %s95, %s96
      %p108 = scmp.eq.s32.totalorder %s23, 1
      %p109 = por %p107, %p108
      %p111 = scmp.ne.s32.totalorder %s96, %s110
      %p112 = scmp.eq.s32.totalorder %s23, 0
      %p113 = por %p111, %p112
      %s115 = sadd.s32 %s114, 1
      %p118 = scmp.eq.s32.totalorder %s17, 1
      %p119 = scmp.ne.s32.totalorder %s114, %s116
      %p120 = scmp.eq.s32.totalorder %s17, 0
      %p121 = por %p119, %p120
      %p122 = scmp.ne.s32.totalorder %s114, %s116
      %p123 = scmp.eq.s32.totalorder %s22, 1
      %p124 = por %p122, %p123
      %p125 = scmp.ne.s32.totalorder %s116, %s117
      %p126 = scmp.eq.s32.totalorder %s22, 0
      %p127 = por %p125, %p126
      %p128 = scmp.ne.s32.totalorder %s116, %s117
      %p129 = scmp.eq.s32.totalorder %s23, 1
      %p130 = por %p128, %p129
      %p132 = scmp.ne.s32.totalorder %s117, %s131
      %p133 = scmp.eq.s32.totalorder %s23, 0
      %p134 = por %p132, %p133
      %s136 = sadd.s32 %s135, 1
      %p139 = scmp.eq.s32.totalorder %s17, 1
      %p140 = scmp.ne.s32.totalorder %s135, %s137
      %p141 = scmp.eq.s32.totalorder %s17, 0
      %p142 = por %p140, %p141
      %p143 = scmp.ne.s32.totalorder %s135, %s137
      %p144 = scmp.eq.s32.totalorder %s22, 1
      %p145 = por %p143, %p144
      %p146 = scmp.ne.s32.totalorder %s137, %s138
      %p147 = scmp.eq.s32.totalorder %s22, 0
      %p148 = por %p146, %p147
      %p149 = scmp.ne.s32.totalorder %s137, %s138
      %p150 = scmp.eq.s32.totalorder %s23, 1
      %p151 = por %p149, %p150
      %p153 = scmp.ne.s32.totalorder %s138, %s152
      %p154 = scmp.eq.s32.totalorder %s23, 0
      %p155 = por %p153, %p154
      %s157 = sadd.s32 %s156, 1
      %p160 = scmp.eq.s32.totalorder %s17, 1
      %p161 = scmp.ne.s32.totalorder %s156, %s158
      %p162 = scmp.eq.s32.totalorder %s17, 0
      %p163 = por %p161, %p162
      %p164 = scmp.ne.s32.totalorder %s156, %s158
      %p165 = scmp.eq.s32.totalorder %s22, 1
      %p166 = por %p164, %p165
      %p167 = scmp.ne.s32.totalorder %s158, %s159
      %p168 = scmp.eq.s32.totalorder %s22, 0
      %p169 = por %p167, %p168
      %p170 = scmp.ne.s32.totalorder %s158, %s159
      %p171 = scmp.eq.s32.totalorder %s23, 1
      %p172 = por %p170, %p171
      %p174 = scmp.ne.s32.totalorder %s159, %s173
      %p175 = scmp.eq.s32.totalorder %s23, 0
      %p176 = por %p174, %p175
      %s177 = ssub.s32 %s17, %s24
      %p178 = scmp.eq.s32.totalorder %s177, 0
      %s180 = sadd.s32 %s179, 1
      %s181 = scalar_select %p178, %s179, %s180
      %p184 = pneg %p178
      %p185 = scmp.eq.s32.totalorder %s17, 1
      %p186 = por %p184, %p185
      %p187 = scmp.ne.s32.totalorder %s179, %s182
      %p188 = scmp.eq.s32.totalorder %s17, 0
      %p189 = por %p187, %p188
      %p190 = scmp.ne.s32.totalorder %s179, %s182
      %p191 = scmp.eq.s32.totalorder %s22, 1
      %p192 = por %p190, %p191
      %p193 = scmp.ne.s32.totalorder %s182, %s183
      %p194 = scmp.eq.s32.totalorder %s22, 0
      %p195 = por %p193, %p194
      %p196 = scmp.ne.s32.totalorder %s182, %s183
      %p197 = scmp.eq.s32.totalorder %s23, 1
      %p198 = por %p196, %p197
      %p200 = scmp.ne.s32.totalorder %s183, %s199
      %p201 = scmp.eq.s32.totalorder %s23, 0
      %p202 = por %p200, %p201
      %p203 = scmp.le.s32.totalorder 1, %s17
      %p204 = scmp.lt.s32.totalorder %s17, 3
      %p205 = pnand %p203, %p204
      %p206 = pneg %p205
      // Predicated region
      $region9: #{mlp_forward.1} parent=5 // pred_check
        _
      $region10: #{mlp_forward.1} parent=5 // pred_check_branch
        %208 = sbr.rel (%p205) target = $region12
      $region11: #{mlp_forward.1} parent=5 // pred_region
        %s209 = ssub.s32 %s17, 1
        // Predicated region
        $region13: #{mlp_forward.1} parent=11 // pred_check
          %p210 = pneg %p64
        $region14: #{mlp_forward.1} parent=11 // pred_check_branch
          %212 = sbr.rel (%p210) target = $region16
        $region15: #{mlp_forward.1} parent=11 // pred_region
          %s214 = ssub.s32 512, 512
          %215 = vsyncadd [#allocation3], %s214
          %s216 = sshll.u32 [#allocation2], 4
          %s217 = int_to_ptr.vmem [resolvable:$true] %s216
          %222 = dma.hbm_to_vmem [thread:$0]  %s1, 512, %s217, [#allocation3], 128, 128, 8
        $region16: #{mlp_forward.1} parent=11 // pred_fallthru
          _
        // Predicated region
        $region17: #{mlp_forward.1} parent=11 // pred_check
          %p223 = pneg %p85
        $region18: #{mlp_forward.1} parent=11 // pred_check_branch
          %225 = sbr.rel (%p223) target = $region20
        $region19: #{mlp_forward.1} parent=11 // pred_region
          _
        $region20: #{mlp_forward.1} parent=11 // pred_fallthru
          _
        // Predicated region
        $region21: #{mlp_forward.1} parent=11 // pred_check
          %p226 = pneg %p106
        $region22: #{mlp_forward.1} parent=11 // pred_check_branch
          %228 = sbr.rel (%p226) target = $region24
        $region23: #{mlp_forward.1} parent=11 // pred_region
          _
        $region24: #{mlp_forward.1} parent=11 // pred_fallthru
          _
        // Predicated region
        $region25: #{mlp_forward.1} parent=11 // pred_check
          %p229 = pneg %p127
        $region26: #{mlp_forward.1} parent=11 // pred_check_branch
          %231 = sbr.rel (%p229) target = $region28
        $region27: #{mlp_forward.1} parent=11 // pred_region
          _
        $region28: #{mlp_forward.1} parent=11 // pred_fallthru
          _
        // Predicated region
        $region29: #{mlp_forward.1} parent=11 // pred_check
          %p232 = pneg %p148
        $region30: #{mlp_forward.1} parent=11 // pred_check_branch
          %234 = sbr.rel (%p232) target = $region32
        $region31: #{mlp_forward.1} parent=11 // pred_region
          _
        $region32: #{mlp_forward.1} parent=11 // pred_fallthru
          _
        // Predicated region
        $region33: #{mlp_forward.1} parent=11 // pred_check
          %p235 = pneg %p169
        $region34: #{mlp_forward.1} parent=11 // pred_check_branch
          %237 = sbr.rel (%p235) target = $region36
        $region35: #{mlp_forward.1} parent=11 // pred_region
          _
        $region36: #{mlp_forward.1} parent=11 // pred_fallthru
          _
      $region12: #{mlp_forward.1} parent=5 // pred_fallthru
        _
      %p238 = scmp.lt.s32.totalorder %s17, 2
      // Predicated region
      $region37: #{mlp_forward.1} parent=5 // pred_check
        %p239 = pneg %p238
      $region38: #{mlp_forward.1} parent=5 // pred_check_branch
        %241 = sbr.rel (%p239) target = $region40
      $region39: #{mlp_forward.1} parent=5 // pred_region
        // Predicated region
        $region41: #{mlp_forward.1} parent=39 // pred_check
          %p242 = pneg %p37
        $region42: #{mlp_forward.1} parent=39 // pred_check_branch
          %244 = sbr.rel (%p242) target = $region44
        $region43: #{mlp_forward.1} parent=39 // pred_region
          %p245 = scmp.lt.s32.totalorder %s17, 1
          %s246 = scalar_select %p245, %s17, 1
          %s247 = smul.addr %s246, 8
          %s248 = scalar_lea.vmem %s0, %s247
        $region44: #{mlp_forward.1} parent=39 // pred_fallthru
          _
      $region40: #{mlp_forward.1} parent=5 // pred_fallthru
        _
      %p249 = scmp.le.s32.totalorder 1, %s17
      %p250 = scmp.lt.s32.totalorder %s17, 3
      %p251 = pnand %p249, %p250
      %p252 = pneg %p251
      // Predicated region
      $region45: #{mlp_forward.1} parent=5 // pred_check
        _
      $region46: #{mlp_forward.1} parent=5 // pred_check_branch
        %254 = sbr.rel (%p251) target = $region48
      $region47: #{mlp_forward.1} parent=5 // pred_region
        %s255 = ssub.s32 %s17, 1
        // Predicated region
        $region49: #{mlp_forward.1} parent=47 // pred_check
          %p256 = pneg %p64
        $region50: #{mlp_forward.1} parent=47 // pred_check_branch
          %258 = sbr.rel (%p256) target = $region52
        $region51: #{mlp_forward.1} parent=47 // pred_region
          %259 = dma.done [#allocation3], 512
        $region52: #{mlp_forward.1} parent=47 // pred_fallthru
          _
        %p260 = scmp.lt.s32.totalorder %s22, 1
        %s261 = scalar_select %p260, %s22, 1
        %s262 = smul.addr %s261, 8
        %s263 = scalar_lea.vmem %s0, %s262
        %p264 = pneg %p43
        %p265 = pneg %p40
        %p266 = pneg %p64
        %p267 = pneg %p61
        %p268 = pneg %p85
        %p269 = pneg %p82
        %p270 = pneg %p106
        %p271 = pneg %p103
        %p272 = pneg %p127
        %p273 = pneg %p124
        %p274 = pneg %p148
        %p275 = pneg %p145
        %p276 = pneg %p169
        %p277 = pneg %p166
        %p278 = pneg %p195
        %p279 = pneg %p192
        %s280 = sand.u32 %s182, 1
        %s281 = scalar_lea.sflag [#allocation4], %s280
        %s282 = sand.u32 %s182, 1
        %s283 = smul.addr %s282, 8
        %s284 = scalar_lea.vmem [#allocation5], %s283
        %p285 = scmp.lt.s32.totalorder %s22, 1
        %s286 = scalar_select %p285, %s22, 1
        %s287 = smul.addr %s286, 8
        %s288 = scalar_lea.vmem %s0, %s287
        %v289 = vld [vmem:[%s288] sm:$0xff]
        %v290 = vld [vmem:[#allocation2] sm:$0xff]
        %v291 = vld [vmem:[#allocation2 + $0x8] sm:$0xff]
        %v292 = vld [vmem:[#allocation2 + $0x10] sm:$0xff]
        %v293 = vld [vmem:[#allocation2 + $0x18] sm:$0xff]
        %v294 = vld [vmem:[%s2] sm:$0x1]
        %v296 = vlaneseq
        %v297 = vshrl.u32 %v296, 7
        %v298 = vsub.s32 0, %v297
        %v299 = vrot.slane %v294, %v298
        %vm301 = vcmask 261120
        %v303 = vsel %vm301, %v289, 0
        %305 = vmatprep.subr.mxu0 0.0
        %306 = vmatpush1.msra.mxu0 %v290
        %307 = vmatprep.subr.mxu0 0.0
        %308 = vmatpush1.msra.mxu0 %v291
        %309 = vmatprep.subr.mxu0 0.0
        %310 = vmatpush1.msra.mxu0 %v292
        %311 = vmatprep.subr.mxu0 0.0
        %312 = vmatpush1.msra.mxu0 %v293
        %313 = vmatprep.subr.mxu0 0.0
        %314 = vmatpush1.msra.mxu0 0.0
        %315 = vmatprep.subr.mxu0 0.0
        %316 = vmatpush1.msra.mxu0 0.0
        %317 = vmatprep.subr.mxu0 0.0
        %318 = vmatpush1.msra.mxu0 0.0
        %319 = vmatprep.subr.mxu0 0.0
        %320 = vmatpush1.msra.mxu0 0.0
        %321 = vmatprep.subr.mxu0 0.0
        %322 = vmatpush1.msra.mxu0 0.0
        %323 = vmatprep.subr.mxu0 0.0
        %324 = vmatpush1.msra.mxu0 0.0
        %325 = vmatprep.subr.mxu0 0.0
        %326 = vmatpush1.msra.mxu0 0.0
        %327 = vmatprep.subr.mxu0 0.0
        %328 = vmatpush1.msra.mxu0 0.0
        %329 = vmatprep.subr.mxu0 0.0
        %330 = vmatpush1.msra.mxu0 0.0
        %331 = vmatprep.subr.mxu0 0.0
        %332 = vmatpush1.msra.mxu0 0.0
        %333 = vmatprep.subr.mxu0 0.0
        %334 = vmatpush1.msra.mxu0 0.0
        %335 = vmatprep.subr.mxu0 0.0
        %336 = vmatpush1.msra.mxu0 0.0
        %337 = vmatprep.subr.mxu0 0.0
        %338 = vmatpush1.msra.mxu0 0.0
        %339 = vmatprep.subr.mxu0 0.0
        %340 = vmatpush1.msra.mxu0 0.0
        %341 = vmatprep.subr.mxu0 0.0
        %342 = vmatpush1.msra.mxu0 0.0
        %343 = vmatprep.subr.mxu0 0.0
        %344 = vmatpush1.msra.mxu0 0.0
        %345 = vmatprep.subr.mxu0 0.0
        %346 = vmatpush1.msra.mxu0 0.0
        %347 = vmatprep.subr.mxu0 0.0
        %348 = vmatpush1.msra.mxu0 0.0
        %349 = vmatprep.subr.mxu0 0.0
        %350 = vmatpush1.msra.mxu0 0.0
        %351 = vmatprep.subr.mxu0 0.0
        %352 = vmatpush1.msra.mxu0 0.0
        %353 = vmatprep.subr.mxu0 0.0
        %354 = vmatpush1.msra.mxu0 0.0
        %355 = vmatprep.subr.mxu0 0.0
        %356 = vmatpush1.msra.mxu0 0.0
        %357 = vmatprep.subr.mxu0 0.0
        %358 = vmatpush1.msra.mxu0 0.0
        %359 = vmatprep.subr.mxu0 0.0
        %360 = vmatpush1.msra.mxu0 0.0
        %361 = vmatprep.subr.mxu0 0.0
        %362 = vmatpush1.msra.mxu0 0.0
        %363 = vmatprep.subr.mxu0 0.0
        %364 = vmatpush1.msra.mxu0 0.0
        %365 = vmatprep.subr.mxu0 0.0
        %366 = vmatpush1.msra.mxu0 0.0
        %367 = vmatprep.subr.mxu0 0.0
        %368 = vmatpush1.msra.mxu0 0.0
        %369 = vmatprep.mubr.f32.mxu0 0.0
        %370 = vmatmul.mubr.f32.gmra.mrb[0].mxu0 %v303
        %v371 = vpop.f32.mrb[0].mxu0
        %v372 = vadd.f32 %v299, %v371
        %v373 = vpop.f32.mrb[0].mxu0
        %374 = vdwg.mxu0
        %v375 = vmax.f32 %v372, 0.0
        %v376 = vld [vmem:[%s3] sm:$0xff]
        %v377 = vld [vmem:[%s3 + $0x8] sm:$0xff]
        %v378 = vld [vmem:[%s3 + $0x10] sm:$0xff]
        %v379 = vld [vmem:[%s3 + $0x18] sm:$0xff]
        %v380 = vld [vmem:[%s3 + $0x20] sm:$0xff]
        %v381 = vld [vmem:[%s3 + $0x28] sm:$0xff]
        %v382 = vld [vmem:[%s3 + $0x30] sm:$0xff]
        %v383 = vld [vmem:[%s3 + $0x38] sm:$0xff]
        %v384 = vld [vmem:[%s3 + $0x40] sm:$0xff]
        %v385 = vld [vmem:[%s3 + $0x48] sm:$0xff]
        %v386 = vld [vmem:[%s3 + $0x50] sm:$0xff]
        %v387 = vld [vmem:[%s3 + $0x58] sm:$0xff]
        %v388 = vld [vmem:[%s3 + $0x60] sm:$0xff]
        %v389 = vld [vmem:[%s3 + $0x68] sm:$0xff]
        %v390 = vld [vmem:[%s3 + $0x70] sm:$0xff]
        %v391 = vld [vmem:[%s3 + $0x78] sm:$0xff]
        %v392 = vld [vmem:[%s4] sm:$0x1]
        %v394 = vlaneseq
        %v395 = vshrl.u32 %v394, 7
        %v396 = vsub.s32 0, %v395
        %v397 = vrot.slane %v392, %v396
        %399 = vmatprep.subr.mxu0 0.0
        %400 = vmatpush1.msra.mxu0 %v376
        %401 = vmatprep.subr.mxu0 0.0
        %402 = vmatpush1.msra.mxu0 %v377
        %403 = vmatprep.subr.mxu0 0.0
        %404 = vmatpush1.msra.mxu0 %v378
        %405 = vmatprep.subr.mxu0 0.0
        %406 = vmatpush1.msra.mxu0 %v379
        %407 = vmatprep.subr.mxu0 0.0
        %408 = vmatpush1.msra.mxu0 %v380
        %409 = vmatprep.subr.mxu0 0.0
        %410 = vmatpush1.msra.mxu0 %v381
        %411 = vmatprep.subr.mxu0 0.0
        %412 = vmatpush1.msra.mxu0 %v382
        %413 = vmatprep.subr.mxu0 0.0
        %414 = vmatpush1.msra.mxu0 %v383
        %415 = vmatprep.subr.mxu0 0.0
        %416 = vmatpush1.msra.mxu0 %v384
        %417 = vmatprep.subr.mxu0 0.0
        %418 = vmatpush1.msra.mxu0 %v385
        %419 = vmatprep.subr.mxu0 0.0
        %420 = vmatpush1.msra.mxu0 %v386
        %421 = vmatprep.subr.mxu0 0.0
        %422 = vmatpush1.msra.mxu0 %v387
        %423 = vmatprep.subr.mxu0 0.0
        %424 = vmatpush1.msra.mxu0 %v388
        %425 = vmatprep.subr.mxu0 0.0
        %426 = vmatpush1.msra.mxu0 %v389
        %427 = vmatprep.subr.mxu0 0.0
        %428 = vmatpush1.msra.mxu0 %v390
        %429 = vmatprep.subr.mxu0 0.0
        %430 = vmatpush1.msra.mxu0 %v391
        %431 = vmatprep.subr.mxu0 0.0
        %432 = vmatpush1.msra.mxu0 0.0
        %433 = vmatprep.subr.mxu0 0.0
        %434 = vmatpush1.msra.mxu0 0.0
        %435 = vmatprep.subr.mxu0 0.0
        %436 = vmatpush1.msra.mxu0 0.0
        %437 = vmatprep.subr.mxu0 0.0
        %438 = vmatpush1.msra.mxu0 0.0
        %439 = vmatprep.subr.mxu0 0.0
        %440 = vmatpush1.msra.mxu0 0.0
        %441 = vmatprep.subr.mxu0 0.0
        %442 = vmatpush1.msra.mxu0 0.0
        %443 = vmatprep.subr.mxu0 0.0
        %444 = vmatpush1.msra.mxu0 0.0
        %445 = vmatprep.subr.mxu0 0.0
        %446 = vmatpush1.msra.mxu0 0.0
        %447 = vmatprep.subr.mxu0 0.0
        %448 = vmatpush1.msra.mxu0 0.0
        %449 = vmatprep.subr.mxu0 0.0
        %450 = vmatpush1.msra.mxu0 0.0
        %451 = vmatprep.subr.mxu0 0.0
        %452 = vmatpush1.msra.mxu0 0.0
        %453 = vmatprep.subr.mxu0 0.0
        %454 = vmatpush1.msra.mxu0 0.0
        %455 = vmatprep.subr.mxu0 0.0
        %456 = vmatpush1.msra.mxu0 0.0
        %457 = vmatprep.subr.mxu0 0.0
        %458 = vmatpush1.msra.mxu0 0.0
        %459 = vmatprep.subr.mxu0 0.0
        %460 = vmatpush1.msra.mxu0 0.0
        %461 = vmatprep.subr.mxu0 0.0
        %462 = vmatpush1.msra.mxu0 0.0
        %463 = vmatprep.mubr.f32.mxu0 0.0
        %464 = vmatmul.mubr.f32.gmra.mrb[0].mxu0 %v375
        %v465 = vpop.f32.mrb[0].mxu0
        %v466 = vadd.f32 %v397, %v465
        %v467 = vpop.f32.mrb[0].mxu0
        %468 = vdwg.mxu0
        %v469 = vmax.f32 %v466, 0.0
        %v470 = vld [vmem:[%s5] sm:$0xff]
        %v471 = vld [vmem:[%s5 + $0x8] sm:$0xff]
        %v472 = vld [vmem:[%s5 + $0x10] sm:$0xff]
        %v473 = vld [vmem:[%s5 + $0x18] sm:$0xff]
        %v474 = vld [vmem:[%s5 + $0x20] sm:$0xff]
        %v475 = vld [vmem:[%s5 + $0x28] sm:$0xff]
        %v476 = vld [vmem:[%s5 + $0x30] sm:$0xff]
        %v477 = vld [vmem:[%s5 + $0x38] sm:$0xff]
        %v478 = vld [vmem:[%s5 + $0x40] sm:$0xff]
        %v479 = vld [vmem:[%s5 + $0x48] sm:$0xff]
        %v480 = vld [vmem:[%s5 + $0x50] sm:$0xff]
        %v481 = vld [vmem:[%s5 + $0x58] sm:$0xff]
        %v482 = vld [vmem:[%s5 + $0x60] sm:$0xff]
        %v483 = vld [vmem:[%s5 + $0x68] sm:$0xff]
        %v484 = vld [vmem:[%s5 + $0x70] sm:$0xff]
        %v485 = vld [vmem:[%s5 + $0x78] sm:$0xff]
        %v486 = vld [vmem:[%s6] sm:$0x1]
        %v488 = vlaneseq
        %v489 = vshrl.u32 %v488, 7
        %v490 = vsub.s32 0, %v489
        %v491 = vrot.slane %v486, %v490
        %493 = vmatprep.subr.mxu0 0.0
        %494 = vmatpush1.msra.mxu0 %v470
        %495 = vmatprep.subr.mxu0 0.0
        %496 = vmatpush1.msra.mxu0 %v471
        %497 = vmatprep.subr.mxu0 0.0
        %498 = vmatpush1.msra.mxu0 %v472
        %499 = vmatprep.subr.mxu0 0.0
        %500 = vmatpush1.msra.mxu0 %v473
        %501 = vmatprep.subr.mxu0 0.0
        %502 = vmatpush1.msra.mxu0 %v474
        %503 = vmatprep.subr.mxu0 0.0
        %504 = vmatpush1.msra.mxu0 %v475
        %505 = vmatprep.subr.mxu0 0.0
        %506 = vmatpush1.msra.mxu0 %v476
        %507 = vmatprep.subr.mxu0 0.0
        %508 = vmatpush1.msra.mxu0 %v477
        %509 = vmatprep.subr.mxu0 0.0
        %510 = vmatpush1.msra.mxu0 %v478
        %511 = vmatprep.subr.mxu0 0.0
        %512 = vmatpush1.msra.mxu0 %v479
        %513 = vmatprep.subr.mxu0 0.0
        %514 = vmatpush1.msra.mxu0 %v480
        %515 = vmatprep.subr.mxu0 0.0
        %516 = vmatpush1.msra.mxu0 %v481
        %517 = vmatprep.subr.mxu0 0.0
        %518 = vmatpush1.msra.mxu0 %v482
        %519 = vmatprep.subr.mxu0 0.0
        %520 = vmatpush1.msra.mxu0 %v483
        %521 = vmatprep.subr.mxu0 0.0
        %522 = vmatpush1.msra.mxu0 %v484
        %523 = vmatprep.subr.mxu0 0.0
        %524 = vmatpush1.msra.mxu0 %v485
        %525 = vmatprep.subr.mxu0 0.0
        %526 = vmatpush1.msra.mxu0 0.0
        %527 = vmatprep.subr.mxu0 0.0
        %528 = vmatpush1.msra.mxu0 0.0
        %529 = vmatprep.subr.mxu0 0.0
        %530 = vmatpush1.msra.mxu0 0.0
        %531 = vmatprep.subr.mxu0 0.0
        %532 = vmatpush1.msra.mxu0 0.0
        %533 = vmatprep.subr.mxu0 0.0
        %534 = vmatpush1.msra.mxu0 0.0
        %535 = vmatprep.subr.mxu0 0.0
        %536 = vmatpush1.msra.mxu0 0.0
        %537 = vmatprep.subr.mxu0 0.0
        %538 = vmatpush1.msra.mxu0 0.0
        %539 = vmatprep.subr.mxu0 0.0
        %540 = vmatpush1.msra.mxu0 0.0
        %541 = vmatprep.subr.mxu0 0.0
        %542 = vmatpush1.msra.mxu0 0.0
        %543 = vmatprep.subr.mxu0 0.0
        %544 = vmatpush1.msra.mxu0 0.0
        %545 = vmatprep.subr.mxu0 0.0
        %546 = vmatpush1.msra.mxu0 0.0
        %547 = vmatprep.subr.mxu0 0.0
        %548 = vmatpush1.msra.mxu0 0.0
        %549 = vmatprep.subr.mxu0 0.0
        %550 = vmatpush1.msra.mxu0 0.0
        %551 = vmatprep.subr.mxu0 0.0
        %552 = vmatpush1.msra.mxu0 0.0
        %553 = vmatprep.subr.mxu0 0.0
        %554 = vmatpush1.msra.mxu0 0.0
        %555 = vmatprep.subr.mxu0 0.0
        %556 = vmatpush1.msra.mxu0 0.0
        %557 = vmatprep.mubr.f32.mxu0 0.0
        %558 = vmatmul.mubr.f32.gmra.mrb[0].mxu0 %v469
        %v559 = vpop.f32.mrb[0].mxu0
        %v560 = vadd.f32 %v491, %v559
        %v561 = vpop.f32.mrb[0].mxu0
        %562 = vdwg.mxu0
        %vm563 = vcmask 130048
        %564 = vst.msk [vmem:[%s284] sm:$0xff] %vm563, %v560
        %s565 = sand.u32 %s182, 1
        %s566 = scalar_lea.sflag [#allocation4], %s565
        %s567 = sand.u32 %s182, 1
        %s568 = smul.addr %s567, 8
        %s569 = scalar_lea.vmem [#allocation5], %s568
        // Predicated region
        $region53: #{mlp_forward.1} parent=47 // pred_check
          %p570 = pneg %p192
        $region54: #{mlp_forward.1} parent=47 // pred_check_branch
          %572 = sbr.rel (%p570) target = $region56
        $region55: #{mlp_forward.1} parent=47 // pred_region
          %s574 = ssub.s32 128, 128
          %575 = vsyncadd %s566, %s574
          %s576 = smul.addr %s22, 128
          %s577 = scalar_lea.hbm %s7, %s576
          %s579 = sshll.u32 %s569, 4
          %s580 = int_to_ptr.vmem [resolvable:$true] %s579
          %582 = dma.vmem_to_hbm [thread:$0]  %s580, 128, %s577, %s566
        $region56: #{mlp_forward.1} parent=47 // pred_fallthru
          _
      $region48: #{mlp_forward.1} parent=5 // pred_fallthru
        _
      %p583 = scmp.le.s32.totalorder 2, %s17
      // Predicated region
      $region57: #{mlp_forward.1} parent=5 // pred_check
        %p584 = pneg %p583
      $region58: #{mlp_forward.1} parent=5 // pred_check_branch
        %586 = sbr.rel (%p584) target = $region60
      $region59: #{mlp_forward.1} parent=5 // pred_region
        %s587 = ssub.s32 %s17, 2
        // Predicated region
        $region61: #{mlp_forward.1} parent=59 // pred_check
          %p588 = pneg %p198
        $region62: #{mlp_forward.1} parent=59 // pred_check_branch
          %590 = sbr.rel (%p588) target = $region64
        $region63: #{mlp_forward.1} parent=59 // pred_region
          %s591 = sand.u32 %s183, 1
          %s592 = scalar_lea.sflag [#allocation4], %s591
          %s593 = sand.u32 %s183, 1
          %s594 = smul.addr %s593, 8
          %s595 = scalar_lea.vmem [#allocation5], %s594
          %596 = dma.done %s592, 128
        $region64: #{mlp_forward.1} parent=59 // pred_fallthru
          _
      $region60: #{mlp_forward.1} parent=5 // pred_fallthru
        _
    $region6: #{mlp_forward.1} parent=1 // loop_footer
      %s21 = sadd.s32 1, %s17
    $region7: #{mlp_forward.1} parent=1 // loop_footer_branch
      %16 = sbr.rel target = $region3
    $region8: #{mlp_forward.1} parent=1 // loop_exit
      _
    %597 = vsyncpa [#allocation3], 1
    %s598 = scalar_lea.sflag [#allocation3], 1
    %599 = vsyncpa %s598, 1
    %600 = vsyncpa [#allocation4], 1
    %s601 = scalar_lea.sflag [#allocation4], 1
    %602 = vsyncpa %s601, 1

</llo_original>
